<compile_context>
chip_gen: v5e
topology: v5e:2x2
jax: 0.10.0
libtpu: 0.0.40
codegen_flags: <defaults>
</compile_context>

<pallas_src>
import functools
import math

import jax
import jax.numpy as jnp
from jax.experimental import pallas as pl
from jax.experimental.pallas import tpu as pltpu

_ON_TPU = jax.default_backend() == "tpu"
MATMUL_DTYPE = jnp.bfloat16 if _ON_TPU else jnp.float32   # matmul-input dtype; accumulation is f32
WEIGHT_DTYPE = MATMUL_DTYPE                                # weights stored pre-cast (no in-kernel cast)
ACT_DTYPE = jnp.bfloat16 if _ON_TPU else jnp.float32       # inter-kernel activation dtype

_NEG_BIG = -1e20
_CLAMP = 1e6
_LN_EPS = 1e-6   # matches nn.LayerNorm(embed_size, eps=1e-06) in the reference


# ----------------------------- in-kernel helpers -----------------------------

def _dot(a, b):
    """2-D MXU matmul with backend-appropriate input dtype and f32 accumulation."""
    return jnp.dot(a.astype(MATMUL_DTYPE), b.astype(MATMUL_DTYPE),
                   preferred_element_type=jnp.float32)


def _bqk(q, k):
    """(B,Q,D) x (B,K,D) -> (B,Q,K); contraction expressed directly (no materialized transpose)."""
    return jnp.einsum("bqd,bkd->bqk", q.astype(MATMUL_DTYPE), k.astype(MATMUL_DTYPE),
                      preferred_element_type=jnp.float32)


def _bqd(p, v):
    """(B,Q,K) x (B,K,D) -> (B,Q,D)."""
    return jnp.einsum("bqk,bkd->bqd", p.astype(MATMUL_DTYPE), v.astype(MATMUL_DTYPE),
                      preferred_element_type=jnp.float32)


def _recip(x):
    if _ON_TPU:
        return pl.reciprocal(x, approx=True)   # EUP slot on TPU
    return 1.0 / x


def _layernorm(x, g, b, eps):
    mu = jnp.mean(x, axis=-1, keepdims=True)
    xc = x - mu
    var = jnp.mean(xc * xc, axis=-1, keepdims=True)
    return xc * jax.lax.rsqrt(var + eps) * g + b


def _pick_batch_tile(n, rows_per_item, target_rows=256):
    """Batch elements per grid step: ~target_rows rows/step, divides n, keeps >=2 grid points."""
    bt = max(1, min(n, max(1, target_rows // max(rows_per_item, 1))))
    while n % bt != 0:
        bt -= 1
    if bt > 1 and (n // bt) < 2:      # leave >=2 parallel grid points for 2-TC chips (v7x)
        bt = max(1, n // 2)
        while n % bt != 0:
            bt -= 1
    return bt


def _const2d(shape):
    return pl.BlockSpec(shape, lambda n: (0, 0))


# ----------------------------- kernel 1: ReLU -> Linear -> + positional encoding -----------------------------

def _proj_pe_kernel(x_ref, w_ref, b_ref, pe_ref, o_ref):
    x = jnp.maximum(x_ref[...].astype(jnp.float32), 0.0)          # nn.ReLU() before the Linear
    bt, L, din = x.shape
    y = _dot(x.reshape(bt * L, din), w_ref[...])                  # Linear over all rows at once
    e = y.shape[-1]
    y = y.reshape(bt, L, e) + b_ref[...].astype(jnp.float32) + pe_ref[...].astype(jnp.float32)
    o_ref[...] = y.astype(o_ref.dtype)


def input_projection(x, w, b, pe):
    """x: (N, L, Din), w: (Din, E), b: (1, E), pe: (L, E) -> (N, L, E)."""
    N, L, Din = x.shape
    E = w.shape[1]
    bt = _pick_batch_tile(N, L)
    return pl.pallas_call(
        _proj_pe_kernel,
        out_shape=jax.ShapeDtypeStruct((N, L, E), ACT_DTYPE),
        grid=(N // bt,),
        in_specs=[
            pl.BlockSpec((bt, L, Din), lambda n: (n, 0, 0)),
            _const2d((Din, E)),
            _const2d((1, E)),
            _const2d((L, E)),
        ],
        out_specs=pl.BlockSpec((bt, L, E), lambda n: (n, 0, 0)),
        compiler_params=pltpu.CompilerParams(dimension_semantics=("parallel",)),
    )(x, w, b, pe)


# ----------------------------- kernel 2: fused TransformerBlock -----------------------------
# SelfAttention + residual + clamp + LayerNorm1 + FFN + residual + LayerNorm2, one pallas_call.

def _block_kernel(*refs, heads, scale, has_mask, eps):
    if has_mask:
        (x_ref, m_ref, wq_ref, wk_ref, wv_ref, wfc_ref, bfc_ref,
         g1_ref, bn1_ref, w1_ref, b1_ref, w2_ref, b2_ref, g2_ref, bn2_ref, o_ref) = refs
    else:
        (x_ref, wq_ref, wk_ref, wv_ref, wfc_ref, bfc_ref,
         g1_ref, bn1_ref, w1_ref, b1_ref, w2_ref, b2_ref, g2_ref, bn2_ref, o_ref) = refs
        m_ref = None

    x = x_ref[...].astype(jnp.float32)       # (Bt, L, E)   value == key == query in Text_Encoder
    bt, L, E = x.shape
    D = E // heads
    x2 = x.reshape(bt * L, E)

    # Q/K/V projections for ALL heads as single full-width matmuls (block-diagonal weights).
    q_all = _dot(x2, wq_ref[...]).reshape(bt, L, E)
    k_all = _dot(x2, wk_ref[...]).reshape(bt, L, E)
    v_all = _dot(x2, wv_ref[...]).reshape(bt, L, E)

    keep = (m_ref[...] != 0) if m_ref is not None else None   # (Bt, L, L), shared across heads

    head_outs = []
    for h in range(heads):                                     # static unroll; scores are per-head
        sl = slice(h * D, (h + 1) * D)
        s = _bqk(q_all[..., sl], k_all[..., sl])               # (Bt, L, L) energy
        if keep is not None:
            s = jnp.where(keep, s, _NEG_BIG)                   # masked_fill(mask == False, -1e20)
        s = jnp.clip(s, -_CLAMP, _CLAMP) * scale               # clamp then / sqrt(embed_size)
        s = s - jnp.max(s, axis=-1, keepdims=True)
        p = jnp.exp(s)
        p = p * _recip(jnp.sum(p, axis=-1, keepdims=True))
        head_outs.append(_bqd(p, v_all[..., sl]))              # (Bt, L, D)

    attn = jnp.concatenate(head_outs, axis=-1).reshape(bt * L, E)
    attn = _dot(attn, wfc_ref[...]) + bfc_ref[...].astype(jnp.float32)     # single fc_out matmul

    # x = norm1(clamp(attention + query)); the residual `query` equals the block input x.
    x1 = _layernorm(jnp.clip(attn + x2, -_CLAMP, _CLAMP),
                    g1_ref[...].astype(jnp.float32), bn1_ref[...].astype(jnp.float32), eps)

    # feed-forward (Linear -> ReLU -> Linear) + residual + LayerNorm2.
    hmid = jnp.maximum(_dot(x1, w1_ref[...]) + b1_ref[...].astype(jnp.float32), 0.0)
    ff = _dot(hmid, w2_ref[...]) + b2_ref[...].astype(jnp.float32)
    y = _layernorm(ff + x1, g2_ref[...].astype(jnp.float32), bn2_ref[...].astype(jnp.float32), eps)

    o_ref[...] = y.reshape(bt, L, E).astype(o_ref.dtype)


def transformer_block(lp, x, mask_i8, heads, eps=_LN_EPS):
    N, L, E = x.shape
    F = lp["w1"].shape[1]
    scale = 1.0 / math.sqrt(E)     # reference divides by sqrt(embed_size), not sqrt(head_dim)
    bt = _pick_batch_tile(N, L)
    has_mask = mask_i8 is not None

    inputs = [x]
    in_specs = [pl.BlockSpec((bt, L, E), lambda n: (n, 0, 0))]
    if has_mask:
        inputs.append(mask_i8)
        in_specs.append(pl.BlockSpec((bt, L, L), lambda n: (n, 0, 0)))

    inputs += [lp["wq"], lp["wk"], lp["wv"], lp["wfc"], lp["bfc"],
               lp["ln1_g"], lp["ln1_b"], lp["w1"], lp["b1"], lp["w2"], lp["b2"],
               lp["ln2_g"], lp["ln2_b"]]
    in_specs += [
        _const2d((E, E)), _const2d((E, E)), _const2d((E, E)), _const2d((E, E)), _const2d((1, E)),
        _const2d((1, E)), _const2d((1, E)), _const2d((E, F)), _const2d((1, F)),
        _const2d((F, E)), _const2d((1, E)), _const2d((1, E)), _const2d((1, E)),
    ]

    kern = functools.partial(_block_kernel, heads=heads, scale=scale,
                             has_mask=has_mask, eps=eps)
    return pl.pallas_call(
        kern,
        out_shape=jax.ShapeDtypeStruct((N, L, E), ACT_DTYPE),
        grid=(N // bt,),
        in_specs=in_specs,
        out_specs=pl.BlockSpec((bt, L, E), lambda n: (n, 0, 0)),
        compiler_params=pltpu.CompilerParams(dimension_semantics=("parallel",)),
    )(*inputs)


# ----------------------------- kernel 3: fused AttentionPooling (attention + projection) -----------------------------

def _pool_kernel(lq_ref, x_ref, wq_ref, wk_ref, wv_ref, wfc_ref, bfc_ref, wp_ref, bp_ref, o_ref,
                 *, heads, scale):
    q = lq_ref[0].astype(jnp.float32)        # (n_out, E) latent queries, shared across batch
    x = x_ref[...].astype(jnp.float32)       # (Bt, L, E)
    bt, L, E = x.shape
    n_out = q.shape[0]
    D = E // heads
    x2 = x.reshape(bt * L, E)

    q_all = _dot(q, wq_ref[...])             # (n_out, E), computed once per grid step
    k_all = _dot(x2, wk_ref[...]).reshape(bt, L, E)
    v_all = _dot(x2, wv_ref[...]).reshape(bt, L, E)
    q_b = jnp.broadcast_to(q_all[None], (bt, n_out, E))     # in-VMEM broadcast (hoisted out of loop)

    head_outs = []
    for h in range(heads):
        sl = slice(h * D, (h + 1) * D)
        s = _bqk(q_b[..., sl], k_all[..., sl])               # (Bt, n_out, L); mask is None here
        s = jnp.clip(s, -_CLAMP, _CLAMP) * scale
        s = s - jnp.max(s, axis=-1, keepdims=True)
        p = jnp.exp(s)
        p = p * _recip(jnp.sum(p, axis=-1, keepdims=True))
        head_outs.append(_bqd(p, v_all[..., sl]))            # (Bt, n_out, D)

    attn = jnp.concatenate(head_outs, axis=-1).reshape(bt * n_out, E)
    y = _dot(attn, wfc_ref[...]) + bfc_ref[...].astype(jnp.float32)        # fc_out
    y = _dot(y, wp_ref[...]) + bp_ref[...].astype(jnp.float32)             # final projection (E -> d_out)
    o_ref[...] = y.reshape(bt, n_out, -1).astype(o_ref.dtype)


def attention_pooling(pp, x, heads):
    N, L, E = x.shape
    n_out = pp["latent_q"].shape[1]
    d_out = pp["w_proj"].shape[1]
    scale = 1.0 / math.sqrt(E)
    bt = _pick_batch_tile(N, L)

    kern = functools.partial(_pool_kernel, heads=heads, scale=scale)
    return pl.pallas_call(
        kern,
        out_shape=jax.ShapeDtypeStruct((N, n_out, d_out), jnp.float32),
        grid=(N // bt,),
        in_specs=[
            pl.BlockSpec((1, n_out, E), lambda n: (0, 0, 0)),   # latent queries: fetched once, reused
            pl.BlockSpec((bt, L, E), lambda n: (n, 0, 0)),
            _const2d((E, E)), _const2d((E, E)), _const2d((E, E)),
            _const2d((E, E)), _const2d((1, E)),
            _const2d((E, d_out)), _const2d((1, d_out)),
        ],
        out_specs=pl.BlockSpec((bt, n_out, d_out), lambda n: (n, 0, 0)),
        compiler_params=pltpu.CompilerParams(dimension_semantics=("parallel",)),
    )(pp["latent_q"], x, pp["wq"], pp["wk"], pp["wv"], pp["wfc"], pp["bfc"],
      pp["w_proj"], pp["b_proj"])


# ----------------------------- host-side glue -----------------------------

def _prep_mask(mask, N, Lq, Lk):
    """Compact int8 (N, Lq, Lk) mask; -1e20 fill is built in-kernel and shared across heads."""
    if mask is None:
        return None
    m = jnp.asarray(mask)
    if m.ndim == 4:
        # TODO(synk): head-dependent masks (shape[1] > 1) would need a per-head mask path; the
        # reference usage is a head-invariant key-padding mask.
        m = m[:, 0]
    if m.ndim == 2:
        m = m[:, None, :]
    return jnp.broadcast_to(m, (N, Lq, Lk)).astype(jnp.int8)


def text_encoder_forward(params, x, mask, embed_size, heads):
    N, L, _ = x.shape
    # TODO(synk): utils.PositionalEncoding source not provided; assuming standard batch-first
    # sinusoidal positional encoding added along the sequence axis, dropout = identity (eval).
    pe = params["pe"][0, :L, :]
    h = input_projection(x, params["w_in"], params["b_in"], pe)   # ReLU -> Linear -> +PE (fused)
    m = _prep_mask(mask, N, L, L)
    for lp in params["layers"]:
        h = transformer_block(lp, h, m, heads)                    # one fused kernel per layer
    return attention_pooling(params["pool"], h, heads)


# ----------------------------- deterministic parameter init (kernel-ready layout) -----------------------------

def _init_linear(key, d_in, d_out, bias=True):
    k1, k2 = jax.random.split(key)
    bound = 1.0 / math.sqrt(d_in)
    w = jax.random.uniform(k1, (d_in, d_out), jnp.float32, -bound, bound)
    b = (jax.random.uniform(k2, (1, d_out), jnp.float32, -bound, bound) if bias
         else jnp.zeros((1, d_out), jnp.float32))
    return w, b


def _init_self_attention(key, embed_size, heads):
    """Per-head (D,D) weights expanded once to block-diagonal (E,E) so all heads use one matmul."""
    D = embed_size // heads
    ks = jax.random.split(key, 4)
    wq, _ = _init_linear(ks[0], D, D, bias=False)
    wk, _ = _init_linear(ks[1], D, D, bias=False)
    wv, _ = _init_linear(ks[2], D, D, bias=False)
    wfc, bfc = _init_linear(ks[3], heads * D, embed_size)
    eye = jnp.eye(heads, dtype=jnp.float32)
    return {
        "wq": jnp.kron(eye, wq).astype(WEIGHT_DTYPE),
        "wk": jnp.kron(eye, wk).astype(WEIGHT_DTYPE),
        "wv": jnp.kron(eye, wv).astype(WEIGHT_DTYPE),
        "wfc": wfc.astype(WEIGHT_DTYPE),
        "bfc": bfc,
    }


def _init_transformer_block(key, embed_size, heads, forward_expansion):
    ks = jax.random.split(key, 3)
    attn = _init_self_attention(ks[0], embed_size, heads)
    w1, b1 = _init_linear(ks[1], embed_size, forward_expansion * embed_size)
    w2, b2 = _init_linear(ks[2], forward_expansion * embed_size, embed_size)
    ones = jnp.ones((1, embed_size), jnp.float32)
    zeros = jnp.zeros((1, embed_size), jnp.float32)
    p = dict(attn)
    p.update({"w1": w1.astype(WEIGHT_DTYPE), "b1": b1,
              "w2": w2.astype(WEIGHT_DTYPE), "b2": b2,
              "ln1_g": ones, "ln1_b": zeros, "ln2_g": ones, "ln2_b": zeros})
    return p


def _make_pos_encoding(max_len, d_model):
    position = jnp.arange(max_len, dtype=jnp.float32)[:, None]
    div_term = jnp.exp(jnp.arange(0, d_model, 2, dtype=jnp.float32) * (-math.log(10000.0) / d_model))
    pe = jnp.zeros((max_len, d_model), jnp.float32)
    pe = pe.at[:, 0::2].set(jnp.sin(position * div_term))
    pe = pe.at[:, 1::2].set(jnp.cos(position * div_term))
    return pe[None]  # (1, max_len, d_model)


def init_text_encoder(key, encoded_dim, embed_size, dim_latent, num_latents,
                      num_layers, heads, forward_expansion, max_len=64):
    ks = jax.random.split(key, num_layers + 4)
    w_in, b_in = _init_linear(ks[0], encoded_dim, embed_size)
    layers = [_init_transformer_block(ks[1 + i], embed_size, heads, forward_expansion)
              for i in range(num_layers)]
    latent_q = jax.random.normal(ks[num_layers + 1], (1, num_latents, embed_size), jnp.float32) * 0.01
    pool_attn = _init_self_attention(ks[num_layers + 2], embed_size, heads)
    w_proj, b_proj = _init_linear(ks[num_layers + 3], embed_size, dim_latent)
    pool = dict(pool_attn)
    pool.update({"latent_q": latent_q, "w_proj": w_proj.astype(WEIGHT_DTYPE), "b_proj": b_proj})
    return {"w_in": w_in.astype(WEIGHT_DTYPE), "b_in": b_in,
            "pe": _make_pos_encoding(max_len, embed_size),
            "layers": layers, "pool": pool}


# ----------------------------- main -----------------------------

if __name__ == "__main__":
    # small, shape-consistent config
    N, L = 2, 8
    encoded_dim = 16
    embed_size = 32
    heads = 4
    num_layers = 2
    forward_expansion = 2
    num_latents = 4
    dim_latent = 16

    key = jax.random.PRNGKey(0)
    kx, kp = jax.random.split(key)
    x = jax.random.normal(kx, (N, L, encoded_dim), jnp.float32)
    params = init_text_encoder(kp, encoded_dim, embed_size, dim_latent, num_latents,
                               num_layers, heads, forward_expansion)

    # mask = None path (as in the reference usage)
    out = text_encoder_forward(params, x, None, embed_size, heads)
    out = jax.block_until_ready(out)
    assert out.shape == (N, num_latents, dim_latent)
    assert bool(jnp.all(jnp.isfinite(out)))

    # exercise the in-kernel mask path with an all-True padding mask (must match the unmasked run)
    mask_all = jnp.ones((N, 1, 1, L), dtype=bool)
    out_masked = text_encoder_forward(params, x, mask_all, embed_size, heads)
    out_masked = jax.block_until_ready(out_masked)
    assert out_masked.shape == (N, num_latents, dim_latent)
    assert bool(jnp.all(jnp.isfinite(out_masked)))
    assert bool(jnp.allclose(out, out_masked, atol=1e-4, rtol=1e-4))

    print("KERNEL_OK")
</pallas_src>

<mosaic_0001>
module attributes {stable_mosaic.version = 11 : i64} {
  func.func @_proj_pe_kernel(%arg0: i32, %arg1: memref<1x8x16xf32, #tpu.memory_space<vmem>>, %arg2: memref<16x32xf32, #tpu.memory_space<vmem>>, %arg3: memref<1x32xf32, #tpu.memory_space<vmem>>, %arg4: memref<8x32xf32, #tpu.memory_space<vmem>>, %arg5: memref<1x8x32xf32, #tpu.memory_space<vmem>>) attributes {dimension_semantics = [#tpu.dimension_semantics<parallel>], iteration_bounds = array<i64: 2>, scalar_prefetch = 0 : i64, scratch_operands = 0 : i64, tpu.core_type = #tpu.core_type<tc>, window_params = [{transform_indices = @transform_0, window_bounds = array<i64: 1, 8, 16>}, {pipeline_mode = #tpu.pipeline_mode<synchronous>, transform_indices = @transform_1, window_bounds = array<i64: 16, 32>}, {pipeline_mode = #tpu.pipeline_mode<synchronous>, transform_indices = @transform_2, window_bounds = array<i64: 1, 32>}, {pipeline_mode = #tpu.pipeline_mode<synchronous>, transform_indices = @transform_3, window_bounds = array<i64: 8, 32>}, {transform_indices = @transform_4, window_bounds = array<i64: 1, 8, 32>}]} {
    %c0 = arith.constant 0 : index
    %c0_0 = arith.constant 0 : index
    %c0_1 = arith.constant 0 : index
    %0 = vector.load %arg1[%c0, %c0_0, %c0_1] : memref<1x8x16xf32, #tpu.memory_space<vmem>>, vector<1x8x16xf32>
    %cst = arith.constant 0.000000e+00 : f32
    %1 = vector.broadcast %cst : f32 to vector<1x8x16xf32>
    %2 = arith.maximumf %0, %1 : vector<1x8x16xf32>
    %3 = vector.shape_cast %2 : vector<1x8x16xf32> to vector<8x16xf32>
    %c0_2 = arith.constant 0 : index
    %c0_3 = arith.constant 0 : index
    %4 = vector.load %arg2[%c0_2, %c0_3] : memref<16x32xf32, #tpu.memory_space<vmem>>, vector<16x32xf32>
    %cst_4 = arith.constant dense<0.000000e+00> : vector<8x32xf32>
    %5 = tpu.matmul %3, %4, %cst_4 {dimension_numbers = #tpu.dot_dimension_numbers<[1], [0], [0], [1], [0, 0, 1, 1], [], []>} : vector<8x16xf32>, vector<16x32xf32>, vector<8x32xf32> -> vector<8x32xf32>
    %6 = vector.shape_cast %5 : vector<8x32xf32> to vector<1x8x32xf32>
    %c0_5 = arith.constant 0 : index
    %c0_6 = arith.constant 0 : index
    %7 = vector.load %arg3[%c0_5, %c0_6] : memref<1x32xf32, #tpu.memory_space<vmem>>, vector<1x32xf32>
    %8 = vector.shape_cast %7 : vector<1x32xf32> to vector<1x1x32xf32>
    %9 = vector.broadcast %8 : vector<1x1x32xf32> to vector<1x8x32xf32>
    %10 = arith.addf %6, %9 : vector<1x8x32xf32>
    %c0_7 = arith.constant 0 : index
    %c0_8 = arith.constant 0 : index
    %11 = vector.load %arg4[%c0_7, %c0_8] : memref<8x32xf32, #tpu.memory_space<vmem>>, vector<8x32xf32>
    %12 = vector.shape_cast %11 : vector<8x32xf32> to vector<1x8x32xf32>
    %13 = arith.addf %10, %12 : vector<1x8x32xf32>
    %c0_9 = arith.constant 0 : index
    %c0_10 = arith.constant 0 : index
    %c0_11 = arith.constant 0 : index
    %14 = vector.load %arg5[%c0_9, %c0_10, %c0_11] : memref<1x8x32xf32, #tpu.memory_space<vmem>>, vector<1x8x32xf32>
    tpu.vector_store %arg5[%c0_9, %c0_10, %c0_11], %13 {strides = array<i32>} : memref<1x8x32xf32, #tpu.memory_space<vmem>>, vector<1x8x32xf32>,
    return
  }
  func.func @transform_0(%arg0: i32) -> (i32, i32, i32) {
    %c0_i32 = arith.constant 0 : i32
    %c0_i32_0 = arith.constant 0 : i32
    %c0_i32_1 = arith.constant 0 : i32
    return %arg0, %c0_i32, %c0_i32_0 : i32, i32, i32
  }
  func.func @transform_1(%arg0: i32) -> (i32, i32) {
    %c0_i32 = arith.constant 0 : i32
    %c0_i32_0 = arith.constant 0 : i32
    %c0_i32_1 = arith.constant 0 : i32
    return %c0_i32, %c0_i32_0 : i32, i32
  }
  func.func @transform_2(%arg0: i32) -> (i32, i32) {
    %c0_i32 = arith.constant 0 : i32
    %c0_i32_0 = arith.constant 0 : i32
    %c0_i32_1 = arith.constant 0 : i32
    return %c0_i32, %c0_i32_0 : i32, i32
  }
  func.func @transform_3(%arg0: i32) -> (i32, i32) {
    %c0_i32 = arith.constant 0 : i32
    %c0_i32_0 = arith.constant 0 : i32
    %c0_i32_1 = arith.constant 0 : i32
    return %c0_i32, %c0_i32_0 : i32, i32
  }
  func.func @transform_4(%arg0: i32) -> (i32, i32, i32) {
    %c0_i32 = arith.constant 0 : i32
    %c0_i32_0 = arith.constant 0 : i32
    %c0_i32_1 = arith.constant 0 : i32
    return %arg0, %c0_i32, %c0_i32_0 : i32, i32, i32
  }
}

</mosaic_0001>

<llo_original>
// kernel: tpu_custom_call.1
$region0: #{tpu_custom_call.1}
  #allocation0 [shape = 'u32[]', space=smem, size = 0x4, offset = 0x4, fixed_abs, tag = 'smem constant byte address 0x4 - core index']
  #allocation1 [shape = 'u32[72,128]{1,0:T(1,128)}', space=vmem, size = 0x9000, scoped, tag = 'internal scratch']
  %s0 = inlined_call_operand.hbm [shape: f32[2,8,16], index: 0, kind: input, shape index: {}]
  %s1 = inlined_call_operand.hbm [shape: f32[16,32], index: 1, kind: input, shape index: {}]
  %s2 = inlined_call_operand.vmem [shape: f32[1,32], index: 2, kind: input, shape index: {}]
  %s3 = inlined_call_operand.hbm [shape: f32[8,32], index: 3, kind: input, shape index: {}]
  %s4 = inlined_call_operand.hbm [shape: f32[2,8,32], index: 4, kind: output, shape index: {}]
  %s5 = sld [smem:[#allocation0]]
  $region61: #{tpu_custom_call.1} parent=0
    _
  %s7 = ssub.s32 1, %s5
  %s8 = scalar_select 0, %s7, %s5
  $region1: #{tpu_custom_call.1} parent=0
    #allocation2 [shape = 'u8[8192]{0}', space=vmem, size = 0x2000, scoped, tag = 'input window, operand 0']
    #allocation3 [shape = 's32[2]{0}', space=sflag, size = 0x8, scoped, tag = 'scoped memory for tpu_custom_call.1']
    #allocation4 [shape = 's32[2]{0}', space=sflag, size = 0x8, scoped, tag = 'scoped memory for tpu_custom_call.1']
    #allocation5 [shape = 'u8[8192]{0}', space=vmem, size = 0x2000, scoped, tag = 'input window, operand 1, single buffered']
    #allocation6 [shape = 's32[1]{0}', space=sflag, size = 0x4, scoped, tag = 'scoped memory for tpu_custom_call.1']
    #allocation7 [shape = 'u8[4096]{0}', space=vmem, size = 0x1000, scoped, tag = 'input window, operand 3, single buffered']
    #allocation8 [shape = 'u8[8192]{0}', space=vmem, size = 0x2000, scoped, tag = 'output window, operand 0']
    %9 = vsyncpa [#allocation3], 0
    %s10 = scalar_lea.sflag [#allocation3], 1
    %11 = vsyncpa %s10, 0
    %12 = vsyncpa [#allocation6], 0
    %13 = vsyncpa [#allocation4], 0
    %s14 = scalar_lea.sflag [#allocation4], 1
    %15 = vsyncpa %s14, 0
    loop: start=0, step=1, limit=4
    $region2: #{tpu_custom_call.1} parent=1 // loop_pre_header
      _
    $region3: #{tpu_custom_call.1} parent=1 // loop_header
      %s17 = sphi 0, %s21
      %p18 = scmp.ge.s32.totalorder %s17, 4
      %s27 = sphi 0, %s29
      %s30 = sphi 0, %s27
      %s31 = sphi 0, %s30
      %s47 = sphi 0, %s31
      %s51 = sphi 0, %s51
      %s53 = sphi 0, %s51
      %s54 = sphi 0, %s53
      %s68 = sphi 0, %s54
      %s72 = sphi 0, %s72
      %s74 = sphi 0, %s72
      %s75 = sphi 0, %s74
      %s89 = sphi 0, %s75
      %s93 = sphi 0, %s93
      %s95 = sphi 0, %s93
      %s96 = sphi 0, %s95
      %s110 = sphi 0, %s96
      %s116 = sphi 0, %s118
      %s119 = sphi 0, %s116
      %s120 = sphi 0, %s119
      %s136 = sphi 0, %s120
    $region4: #{tpu_custom_call.1} parent=1 // loop_header_branch
      %20 = sbr.rel (%p18) target = $region8
    $region5: #{tpu_custom_call.1} parent=1 // loop_body
      %s22 = ssub.s32 %s17, 1
      %s23 = ssub.s32 %s17, 2
      %s24 = sadd.s32 %s17, 1
      %s25 = ssub.s32 %s17, %s24
      %p26 = scmp.eq.s32.totalorder %s25, 0
      %s28 = sadd.s32 %s27, 1
      %s29 = scalar_select %p26, %s27, %s28
      %p32 = pneg %p26
      %p33 = scmp.eq.s32.totalorder %s17, 1
      %p34 = por %p32, %p33
      %p35 = scmp.ne.s32.totalorder %s27, %s30
      %p36 = scmp.eq.s32.totalorder %s17, 0
      %p37 = por %p35, %p36
      %p38 = scmp.ne.s32.totalorder %s27, %s30
      %p39 = scmp.eq.s32.totalorder %s22, 1
      %p40 = por %p38, %p39
      %p41 = scmp.ne.s32.totalorder %s30, %s31
      %p42 = scmp.eq.s32.totalorder %s22, 0
      %p43 = por %p41, %p42
      %p44 = scmp.ne.s32.totalorder %s30, %s31
      %p45 = scmp.eq.s32.totalorder %s23, 1
      %p46 = por %p44, %p45
      %p48 = scmp.ne.s32.totalorder %s31, %s47
      %p49 = scmp.eq.s32.totalorder %s23, 0
      %p50 = por %p48, %p49
      %s52 = sadd.s32 %s51, 1
      %p55 = scmp.eq.s32.totalorder %s17, 1
      %p56 = scmp.ne.s32.totalorder %s51, %s53
      %p57 = scmp.eq.s32.totalorder %s17, 0
      %p58 = por %p56, %p57
      %p59 = scmp.ne.s32.totalorder %s51, %s53
      %p60 = scmp.eq.s32.totalorder %s22, 1
      %p61 = por %p59, %p60
      %p62 = scmp.ne.s32.totalorder %s53, %s54
      %p63 = scmp.eq.s32.totalorder %s22, 0
      %p64 = por %p62, %p63
      %p65 = scmp.ne.s32.totalorder %s53, %s54
      %p66 = scmp.eq.s32.totalorder %s23, 1
      %p67 = por %p65, %p66
      %p69 = scmp.ne.s32.totalorder %s54, %s68
      %p70 = scmp.eq.s32.totalorder %s23, 0
      %p71 = por %p69, %p70
      %s73 = sadd.s32 %s72, 1
      %p76 = scmp.eq.s32.totalorder %s17, 1
      %p77 = scmp.ne.s32.totalorder %s72, %s74
      %p78 = scmp.eq.s32.totalorder %s17, 0
      %p79 = por %p77, %p78
      %p80 = scmp.ne.s32.totalorder %s72, %s74
      %p81 = scmp.eq.s32.totalorder %s22, 1
      %p82 = por %p80, %p81
      %p83 = scmp.ne.s32.totalorder %s74, %s75
      %p84 = scmp.eq.s32.totalorder %s22, 0
      %p85 = por %p83, %p84
      %p86 = scmp.ne.s32.totalorder %s74, %s75
      %p87 = scmp.eq.s32.totalorder %s23, 1
      %p88 = por %p86, %p87
      %p90 = scmp.ne.s32.totalorder %s75, %s89
      %p91 = scmp.eq.s32.totalorder %s23, 0
      %p92 = por %p90, %p91
      %s94 = sadd.s32 %s93, 1
      %p97 = scmp.eq.s32.totalorder %s17, 1
      %p98 = scmp.ne.s32.totalorder %s93, %s95
      %p99 = scmp.eq.s32.totalorder %s17, 0
      %p100 = por %p98, %p99
      %p101 = scmp.ne.s32.totalorder %s93, %s95
      %p102 = scmp.eq.s32.totalorder %s22, 1
      %p103 = por %p101, %p102
      %p104 = scmp.ne.s32.totalorder %s95, %s96
      %p105 = scmp.eq.s32.totalorder %s22, 0
      %p106 = por %p104, %p105
      %p107 = scmp.ne.s32.totalorder %s95, %s96
      %p108 = scmp.eq.s32.totalorder %s23, 1
      %p109 = por %p107, %p108
      %p111 = scmp.ne.s32.totalorder %s96, %s110
      %p112 = scmp.eq.s32.totalorder %s23, 0
      %p113 = por %p111, %p112
      %s114 = ssub.s32 %s17, %s24
      %p115 = scmp.eq.s32.totalorder %s114, 0
      %s117 = sadd.s32 %s116, 1
      %s118 = scalar_select %p115, %s116, %s117
      %p121 = pneg %p115
      %p122 = scmp.eq.s32.totalorder %s17, 1
      %p123 = por %p121, %p122
      %p124 = scmp.ne.s32.totalorder %s116, %s119
      %p125 = scmp.eq.s32.totalorder %s17, 0
      %p126 = por %p124, %p125
      %p127 = scmp.ne.s32.totalorder %s116, %s119
      %p128 = scmp.eq.s32.totalorder %s22, 1
      %p129 = por %p127, %p128
      %p130 = scmp.ne.s32.totalorder %s119, %s120
      %p131 = scmp.eq.s32.totalorder %s22, 0
      %p132 = por %p130, %p131
      %p133 = scmp.ne.s32.totalorder %s119, %s120
      %p134 = scmp.eq.s32.totalorder %s23, 1
      %p135 = por %p133, %p134
      %p137 = scmp.ne.s32.totalorder %s120, %s136
      %p138 = scmp.eq.s32.totalorder %s23, 0
      %p139 = por %p137, %p138
      %p140 = scmp.le.s32.totalorder 1, %s17
      %p141 = scmp.lt.s32.totalorder %s17, 3
      %p142 = pnand %p140, %p141
      %p143 = pneg %p142
      // Predicated region
      $region9: #{tpu_custom_call.1} parent=5 // pred_check
        _
      $region10: #{tpu_custom_call.1} parent=5 // pred_check_branch
        %145 = sbr.rel (%p142) target = $region12
      $region11: #{tpu_custom_call.1} parent=5 // pred_region
        %s146 = ssub.s32 %s17, 1
        // Predicated region
        $region13: #{tpu_custom_call.1} parent=11 // pred_check
          %p147 = pneg %p64
        $region14: #{tpu_custom_call.1} parent=11 // pred_check_branch
          %149 = sbr.rel (%p147) target = $region16
        $region15: #{tpu_custom_call.1} parent=11 // pred_region
          %151 = vsyncadd [#allocation6], 0
          %s152 = sshll.u32 %s1, 4
          %s153 = int_to_ptr.hbm [resolvable:$true] %s152
          %s154 = sshll.u32 [#allocation5], 4
          %s155 = int_to_ptr.vmem [resolvable:$true] %s154
          %160 = dma.hbm_to_vmem [thread:$0]  %s153, 256, %s155, [#allocation6], 128, 128, 8
        $region16: #{tpu_custom_call.1} parent=11 // pred_fallthru
          _
        // Predicated region
        $region17: #{tpu_custom_call.1} parent=11 // pred_check
          %p161 = pneg %p85
        $region18: #{tpu_custom_call.1} parent=11 // pred_check_branch
          %163 = sbr.rel (%p161) target = $region20
        $region19: #{tpu_custom_call.1} parent=11 // pred_region
          _
        $region20: #{tpu_custom_call.1} parent=11 // pred_fallthru
          _
        // Predicated region
        $region21: #{tpu_custom_call.1} parent=11 // pred_check
          %p164 = pneg %p106
        $region22: #{tpu_custom_call.1} parent=11 // pred_check_branch
          %166 = sbr.rel (%p164) target = $region24
        $region23: #{tpu_custom_call.1} parent=11 // pred_region
          %168 = vsyncadd [#allocation6], 0
          %s170 = sshll.u32 %s3, 4
          %s171 = int_to_ptr.hbm [resolvable:$true] %s170
          %s172 = sshll.u32 [#allocation7], 4
          %s173 = int_to_ptr.vmem [resolvable:$true] %s172
          %175 = dma.hbm_to_vmem [thread:$0]  %s171, 128, %s173, [#allocation6]
        $region24: #{tpu_custom_call.1} parent=11 // pred_fallthru
          _
      $region12: #{tpu_custom_call.1} parent=5 // pred_fallthru
        _
      %p176 = scmp.lt.s32.totalorder %s17, 2
      // Predicated region
      $region25: #{tpu_custom_call.1} parent=5 // pred_check
        %p177 = pneg %p176
      $region26: #{tpu_custom_call.1} parent=5 // pred_check_branch
        %179 = sbr.rel (%p177) target = $region28
      $region27: #{tpu_custom_call.1} parent=5 // pred_region
        // Predicated region
        $region29: #{tpu_custom_call.1} parent=27 // pred_check
          %p180 = pneg %p37
        $region30: #{tpu_custom_call.1} parent=27 // pred_check_branch
          %182 = sbr.rel (%p180) target = $region32
        $region31: #{tpu_custom_call.1} parent=27 // pred_region
          %s183 = sand.u32 %s27, 1
          %s184 = scalar_lea.sflag [#allocation3], %s183
          %s185 = sand.u32 %s27, 1
          %s186 = smul.addr %s185, 8
          %s187 = scalar_lea.vmem [#allocation2], %s186
          %189 = vsyncadd %s184, 0
          %s190 = smul.addr %s17, 8
          %s191 = scalar_lea.hbm %s0, %s190
          %s193 = sshll.u32 %s191, 4
          %s194 = int_to_ptr.hbm [resolvable:$true] %s193
          %s195 = sshll.u32 %s187, 4
          %s196 = int_to_ptr.vmem [resolvable:$true] %s195
          %198 = dma.hbm_to_vmem [thread:$0]  %s194, 128, %s196, %s184
        $region32: #{tpu_custom_call.1} parent=27 // pred_fallthru
          _
      $region28: #{tpu_custom_call.1} parent=5 // pred_fallthru
        _
      %p199 = scmp.le.s32.totalorder 1, %s17
      %p200 = scmp.lt.s32.totalorder %s17, 3
      %p201 = pnand %p199, %p200
      %p202 = pneg %p201
      // Predicated region
      $region33: #{tpu_custom_call.1} parent=5 // pred_check
        _
      $region34: #{tpu_custom_call.1} parent=5 // pred_check_branch
        %204 = sbr.rel (%p201) target = $region36
      $region35: #{tpu_custom_call.1} parent=5 // pred_region
        %s205 = ssub.s32 %s17, 1
        %s206 = sand.u32 %s30, 1
        %s207 = scalar_lea.sflag [#allocation3], %s206
        %s208 = sand.u32 %s30, 1
        %s209 = smul.addr %s208, 8
        %s210 = scalar_lea.vmem [#allocation2], %s209
        // Predicated region
        $region37: #{tpu_custom_call.1} parent=35 // pred_check
          %p211 = pneg %p43
        $region38: #{tpu_custom_call.1} parent=35 // pred_check_branch
          %213 = sbr.rel (%p211) target = $region40
        $region39: #{tpu_custom_call.1} parent=35 // pred_region
          %215 = dma.done %s207, 128
        $region40: #{tpu_custom_call.1} parent=35 // pred_fallthru
          _
        // Predicated region
        $region41: #{tpu_custom_call.1} parent=35 // pred_check
          %p216 = pneg %p64
        $region42: #{tpu_custom_call.1} parent=35 // pred_check_branch
          %218 = sbr.rel (%p216) target = $region44
        $region43: #{tpu_custom_call.1} parent=35 // pred_region
          %220 = dma.done [#allocation6], 256
        $region44: #{tpu_custom_call.1} parent=35 // pred_fallthru
          _
        // Predicated region
        $region45: #{tpu_custom_call.1} parent=35 // pred_check
          %p221 = pneg %p106
        $region46: #{tpu_custom_call.1} parent=35 // pred_check_branch
          %223 = sbr.rel (%p221) target = $region48
        $region47: #{tpu_custom_call.1} parent=35 // pred_region
          %225 = dma.done [#allocation6], 128
        $region48: #{tpu_custom_call.1} parent=35 // pred_fallthru
          _
        %s226 = sand.u32 %s30, 1
        %s227 = scalar_lea.sflag [#allocation3], %s226
        %s228 = sand.u32 %s30, 1
        %s229 = smul.addr %s228, 8
        %s230 = scalar_lea.vmem [#allocation2], %s229
        %p231 = pneg %p43
        %p232 = pneg %p40
        %p233 = pneg %p64
        %p234 = pneg %p61
        %p235 = pneg %p85
        %p236 = pneg %p82
        %p237 = pneg %p106
        %p238 = pneg %p103
        %p239 = pneg %p132
        %p240 = pneg %p129
        %s241 = sand.u32 %s119, 1
        %s242 = scalar_lea.sflag [#allocation4], %s241
        %s243 = sand.u32 %s119, 1
        %s244 = smul.addr %s243, 8
        %s245 = scalar_lea.vmem [#allocation8], %s244
        %v246 = vld [vmem:[%s210] sm:$0xff]
        %v247 = vmax.f32 %v246, 0.0
        %v248 = vld [vmem:[#allocation5] sm:$0xff]
        %v249 = vld [vmem:[#allocation5 + $0x8] sm:$0xff]
        %vm250 = vcmask 130048
        %v252 = vsel %vm250, %v247, 0
        %254 = vmatpush.msra.mxu0 0.0
        %255 = vmatpush.msra.mxu0 0.0
        %256 = vmatpush.msra.mxu0 0.0
        %257 = vmatpush.msra.mxu0 0.0
        %258 = vmatpush.msra.mxu0 0.0
        %259 = vmatpush.msra.mxu0 0.0
        %260 = vmatpush.msra.mxu0 0.0
        %261 = vmatpush.msra.mxu0 0.0
        %262 = vmatpush.msra.mxu0 0.0
        %263 = vmatpush.msra.mxu0 0.0
        %264 = vmatpush.msra.mxu0 0.0
        %265 = vmatpush.msra.mxu0 0.0
        %266 = vmatpush.msra.mxu0 0.0
        %267 = vmatpush.msra.mxu0 0.0
        %268 = vmatpush.msra.mxu0 %v249
        %269 = vmatpush.msra.mxu0 %v248
        %270 = vmatmul.f32.gmra.mxu0 %v252
        %v271 = vpop.f32.mrf.mxu0
        %v272 = vadd.f32 0.0, %v271
        %273 = vdwg.mxu0
        %v274 = vld [vmem:[%s2] sm:$0x1]
        %v276 = vperm.slane %v274, 0
        %v278 = vadd.f32 %v272, %v276
        %v279 = vld [vmem:[#allocation7] sm:$0xff]
        %v280 = vadd.f32 %v278, %v279
        %vm281 = vcmask 261120
        %282 = vst.msk [vmem:[%s245] sm:$0xff] %vm281, %v280
        %s283 = sand.u32 %s119, 1
        %s284 = scalar_lea.sflag [#allocation4], %s283
        %s285 = sand.u32 %s119, 1
        %s286 = smul.addr %s285, 8
        %s287 = scalar_lea.vmem [#allocation8], %s286
        // Predicated region
        $region49: #{tpu_custom_call.1} parent=35 // pred_check
          %p288 = pneg %p129
        $region50: #{tpu_custom_call.1} parent=35 // pred_check_branch
          %290 = sbr.rel (%p288) target = $region52
        $region51: #{tpu_custom_call.1} parent=35 // pred_region
          %292 = vsyncadd %s284, 0
          %s293 = smul.addr %s22, 8
          %s294 = scalar_lea.hbm %s4, %s293
          %s296 = sshll.u32 %s287, 4
          %s297 = int_to_ptr.vmem [resolvable:$true] %s296
          %s298 = sshll.u32 %s294, 4
          %s299 = int_to_ptr.hbm [resolvable:$true] %s298
          %301 = dma.vmem_to_hbm [thread:$0]  %s297, 128, %s299, %s284
        $region52: #{tpu_custom_call.1} parent=35 // pred_fallthru
          _
      $region36: #{tpu_custom_call.1} parent=5 // pred_fallthru
        _
      %p302 = scmp.le.s32.totalorder 2, %s17
      // Predicated region
      $region53: #{tpu_custom_call.1} parent=5 // pred_check
        %p303 = pneg %p302
      $region54: #{tpu_custom_call.1} parent=5 // pred_check_branch
        %305 = sbr.rel (%p303) target = $region56
      $region55: #{tpu_custom_call.1} parent=5 // pred_region
        %s306 = ssub.s32 %s17, 2
        // Predicated region
        $region57: #{tpu_custom_call.1} parent=55 // pred_check
          %p307 = pneg %p135
        $region58: #{tpu_custom_call.1} parent=55 // pred_check_branch
          %309 = sbr.rel (%p307) target = $region60
        $region59: #{tpu_custom_call.1} parent=55 // pred_region
          %s310 = sand.u32 %s120, 1
          %s311 = scalar_lea.sflag [#allocation4], %s310
          %s312 = sand.u32 %s120, 1
          %s313 = smul.addr %s312, 8
          %s314 = scalar_lea.vmem [#allocation8], %s313
          %316 = dma.done %s311, 128
        $region60: #{tpu_custom_call.1} parent=55 // pred_fallthru
          _
      $region56: #{tpu_custom_call.1} parent=5 // pred_fallthru
        _
    $region6: #{tpu_custom_call.1} parent=1 // loop_footer
      %s21 = sadd.s32 1, %s17
    $region7: #{tpu_custom_call.1} parent=1 // loop_footer_branch
      %16 = sbr.rel target = $region3
    $region8: #{tpu_custom_call.1} parent=1 // loop_exit
      _
    %317 = vsyncpa [#allocation3], 1
    %s318 = scalar_lea.sflag [#allocation3], 1
    %319 = vsyncpa %s318, 1
    %320 = vsyncpa [#allocation6], 1
    %321 = vsyncpa [#allocation4], 1
    %s322 = scalar_lea.sflag [#allocation4], 1
    %323 = vsyncpa %s322, 1

</llo_original>
